<compile_context>
chip_gen: v7x
topology: tpu7x:2x2x1
jax: 0.10.0
libtpu: 0.0.40
codegen_flags: <defaults>
</compile_context>

<pallas_src>
import jax
import jax.numpy as jnp
from jax.experimental import pallas as pl
from jax.experimental.pallas import tpu as pltpu

_LANES = 128                  # vreg lane width: last dim multiple of 128
_TILE_ROWS = 8192             # 8192 x 128 f32 = 4 MiB/buffer -> ~24 MiB double-buffered
_MIN_PALLAS_ELEMS = 1 << 18   # below ~1 MiB total, fused XLA 2*a+b wins on overhead
_VMEM_CAP_BYTES = 48 * 1024 * 1024   # stay well inside v7x's 64 MiB physical VMEM


def _my_add_kernel(a_ref, b_ref, o_ref):
    # out = 2*a + b on one lane-dense (tr, 128) VMEM tile.
    # a + a + b is dtype-preserving (no float promotion for integer inputs).
    a = a_ref[...]
    o_ref[...] = a + a + b_ref[...]


def my_add(a: jax.Array, b: jax.Array, *, force_pallas: bool = False) -> jax.Array:
    assert a.shape == b.shape and a.dtype == b.dtype
    orig_shape = a.shape
    total = a.size

    # Tiny tensors: per-call / pipeline-ramp overhead dominates -> fused XLA.
    # TODO(synk): make this threshold generation-aware (raise to ~1M on v7x).
    if total < _MIN_PALLAS_ELEMS and not force_pallas:
        return a + a + b

    # Lane-dense view: flatten to (rows, 128).  Only pad when the element
    # count is not already a multiple of 128; never pad to a tile multiple —
    # Pallas masks the ragged last grid block itself, so the common path is
    # a pure (free) reshape with zero extra HBM traffic.
    rows = pl.cdiv(total, _LANES)
    padded_total = rows * _LANES

    def _to_2d(x):
        flat = x.reshape(-1)
        if padded_total != total:
            flat = jnp.pad(flat, (0, padded_total - total))
        return flat.reshape(rows, _LANES)

    a2 = _to_2d(a)
    b2 = _to_2d(b)

    # Full-dim block when small (allowed even if rows % 8 != 0 via the
    # "block equals full array dim" exception); otherwise big aligned tiles.
    tr = _TILE_ROWS if rows >= _TILE_ROWS else rows
    grid = (pl.cdiv(rows, tr),)

    # VMEM budget from the actual footprint: 3 arrays x 2 pipeline buffers
    # x tile bytes, plus headroom; capped to be safe on v7x's 64 MiB VMEM.
    tile_bytes = tr * _LANES * jnp.dtype(a.dtype).itemsize
    vmem_limit = min(3 * 2 * tile_bytes + (4 << 20), _VMEM_CAP_BYTES)

    out2 = pl.pallas_call(
        _my_add_kernel,
        out_shape=jax.ShapeDtypeStruct((rows, _LANES), a.dtype),
        grid=grid,
        in_specs=[
            pl.BlockSpec((tr, _LANES), lambda i: (i, 0)),
            pl.BlockSpec((tr, _LANES), lambda i: (i, 0)),
        ],
        out_specs=pl.BlockSpec((tr, _LANES), lambda i: (i, 0)),
        compiler_params=pltpu.CompilerParams(
            # Every block is independent -> eligible for megacore sharding.
            # TODO(synk): evaluate pltpu.CORE_PARALLEL / pl.core_map on v7x to
            # guarantee both TensorCores stream (keep "parallel" for safety).
            dimension_semantics=("parallel",),
            vmem_limit_bytes=vmem_limit,
        ),
    )(a2, b2)

    flat = out2.reshape(-1)
    if padded_total != total:
        flat = flat[:total]          # only sliced in the rare unaligned case
    return flat.reshape(orig_shape)


if __name__ == "__main__":
    key = jax.random.PRNGKey(0)
    ka, kb = jax.random.split(key)
    shape = (2, 4, 16, 16)  # NCHW-style small test shape (2048 elems, 128-aligned)
    a = jax.random.normal(ka, shape, dtype=jnp.float32)
    b = jax.random.normal(kb, shape, dtype=jnp.float32)

    # force_pallas=True so the test exercises the kernel even though this
    # 8 KiB input would normally take the fused-XLA fast path.
    out = my_add(a, b, force_pallas=True)
    out = jax.block_until_ready(out)

    ref = 2.0 * a + b
    assert out.shape == ref.shape and out.dtype == ref.dtype
    assert jnp.allclose(out, ref, atol=1e-6, rtol=1e-6)

    print("KERNEL_OK")
</pallas_src>

<mosaic_0001>
module attributes {stable_mosaic.version = 11 : i64} {
  func.func @_my_add_kernel(%arg0: i32, %arg1: memref<16x128xf32, #tpu.memory_space<vmem>>, %arg2: memref<16x128xf32, #tpu.memory_space<vmem>>, %arg3: memref<16x128xf32, #tpu.memory_space<vmem>>) attributes {dimension_semantics = [#tpu.dimension_semantics<parallel>], iteration_bounds = array<i64: 1>, scalar_prefetch = 0 : i64, scratch_operands = 0 : i64, tpu.core_type = #tpu.core_type<tc>, window_params = [{transform_indices = @transform_0, window_bounds = array<i64: 16, 128>}, {transform_indices = @transform_1, window_bounds = array<i64: 16, 128>}, {transform_indices = @transform_2, window_bounds = array<i64: 16, 128>}]} {
    %c0 = arith.constant 0 : index
    %c0_0 = arith.constant 0 : index
    %0 = vector.load %arg1[%c0, %c0_0] : memref<16x128xf32, #tpu.memory_space<vmem>>, vector<16x128xf32>
    %1 = arith.addf %0, %0 : vector<16x128xf32>
    %c0_1 = arith.constant 0 : index
    %c0_2 = arith.constant 0 : index
    %2 = vector.load %arg2[%c0_1, %c0_2] : memref<16x128xf32, #tpu.memory_space<vmem>>, vector<16x128xf32>
    %3 = arith.addf %1, %2 : vector<16x128xf32>
    %c0_3 = arith.constant 0 : index
    %c0_4 = arith.constant 0 : index
    %4 = vector.load %arg3[%c0_3, %c0_4] : memref<16x128xf32, #tpu.memory_space<vmem>>, vector<16x128xf32>
    tpu.vector_store %arg3[%c0_3, %c0_4], %3 {strides = array<i32>} : memref<16x128xf32, #tpu.memory_space<vmem>>, vector<16x128xf32>,
    return
  }
  func.func @transform_0(%arg0: i32) -> (i32, i32) {
    %c0_i32 = arith.constant 0 : i32
    %c0_i32_0 = arith.constant 0 : i32
    return %arg0, %c0_i32 : i32, i32
  }
  func.func @transform_1(%arg0: i32) -> (i32, i32) {
    %c0_i32 = arith.constant 0 : i32
    %c0_i32_0 = arith.constant 0 : i32
    return %arg0, %c0_i32 : i32, i32
  }
  func.func @transform_2(%arg0: i32) -> (i32, i32) {
    %c0_i32 = arith.constant 0 : i32
    %c0_i32_0 = arith.constant 0 : i32
    return %arg0, %c0_i32 : i32, i32
  }
}

</mosaic_0001>

<llo_original>
// kernel: tpu_custom_call.1
$region0: #{tpu_custom_call.1}
  #allocation0 [shape = 'u32[]', space=smem, size = 0x4, offset = 0x4, fixed_abs, tag = 'smem constant byte address 0x4 - core index']
  #allocation1 [shape = 'u32[144,128]{1,0:T(1,128)}', space=vmem, size = 0x12000, scoped, tag = 'internal scratch']
  %s0 = inlined_call_operand.hbm [shape: f32[16,128], index: 0, kind: input, shape index: {}]
  %s1 = inlined_call_operand.hbm [shape: f32[16,128], index: 1, kind: input, shape index: {}]
  %s2 = inlined_call_operand.hbm [shape: f32[16,128], index: 2, kind: output, shape index: {}]
  %s3 = sld [smem:[#allocation0]]
  $region26: #{tpu_custom_call.1} parent=0
    _
  %s5 = ssub.s32 1, %s3
  %s6 = scalar_select 0, %s5, %s3
  $region1: #{tpu_custom_call.1} parent=0
    #allocation2 [shape = 'u8[8192]{0}', space=vmem, size = 0x2000, scoped, tag = 'input window, operand 0, single buffered']
    #allocation3 [shape = 's32[1]{0}', space=sflag, size = 0x4, scoped, tag = 'scoped memory for tpu_custom_call.1']
    #allocation4 [shape = 's32[1]{0}', space=sflag, size = 0x4, scoped, tag = 'scoped memory for tpu_custom_call.1']
    #allocation5 [shape = 'u8[8192]{0}', space=vmem, size = 0x2000, scoped, tag = 'input window, operand 1, single buffered']
    #allocation6 [shape = 's32[1]{0}', space=sflag, size = 0x4, scoped, tag = 'scoped memory for tpu_custom_call.1']
    #allocation7 [shape = 'u8[8192]{0}', space=vmem, size = 0x2000, scoped, tag = 'output window, operand 0, single buffered']
    %7 = vsyncpa [#allocation3], 0
    %8 = vsyncpa [#allocation6], 0
    %9 = vsyncpa [#allocation4], 0
    // Predicated region
    $region2: #{tpu_custom_call.1} parent=1 // pred_check
      _
    $region3: #{tpu_custom_call.1} parent=1 // pred_check_branch
      %11 = sbr.rel (0) target = $region5
    $region4: #{tpu_custom_call.1} parent=1 // pred_region
      %s13 = ssub.s32 256, 256
      %14 = vsyncadd [#allocation3], %s13
      %s15 = sshll.u32 [#allocation2], 4
      %s16 = int_to_ptr.vmem [resolvable:$true] %s15
      %21 = dma.hbm_to_vmem [thread:$0]  %s0, 256, %s16, [#allocation3], 128, 128, 8
    $region5: #{tpu_custom_call.1} parent=1 // pred_fallthru
      _
    // Predicated region
    $region6: #{tpu_custom_call.1} parent=1 // pred_check
      _
    $region7: #{tpu_custom_call.1} parent=1 // pred_check_branch
      %23 = sbr.rel (0) target = $region9
    $region8: #{tpu_custom_call.1} parent=1 // pred_region
      %s25 = ssub.s32 256, 256
      %26 = vsyncadd [#allocation6], %s25
      %s27 = sshll.u32 [#allocation5], 4
      %s28 = int_to_ptr.vmem [resolvable:$true] %s27
      %33 = dma.hbm_to_vmem [thread:$0]  %s1, 256, %s28, [#allocation6], 128, 128, 8
    $region9: #{tpu_custom_call.1} parent=1 // pred_fallthru
      _
    // Predicated region
    $region10: #{tpu_custom_call.1} parent=1 // pred_check
      _
    $region11: #{tpu_custom_call.1} parent=1 // pred_check_branch
      %35 = sbr.rel (0) target = $region13
    $region12: #{tpu_custom_call.1} parent=1 // pred_region
      %36 = dma.done [#allocation3], 256
    $region13: #{tpu_custom_call.1} parent=1 // pred_fallthru
      _
    // Predicated region
    $region14: #{tpu_custom_call.1} parent=1 // pred_check
      _
    $region15: #{tpu_custom_call.1} parent=1 // pred_check_branch
      %38 = sbr.rel (0) target = $region17
    $region16: #{tpu_custom_call.1} parent=1 // pred_region
      %39 = dma.done [#allocation6], 256
    $region17: #{tpu_custom_call.1} parent=1 // pred_fallthru
      _
    %v40 = vld [vmem:[#allocation2] sm:$0xff]
    %v41 = vld [vmem:[#allocation2 + $0x8] sm:$0xff]
    %v42 = vadd.f32 %v40, %v40
    %v43 = vadd.f32 %v41, %v41
    %v44 = vld [vmem:[#allocation5] sm:$0xff]
    %v45 = vld [vmem:[#allocation5 + $0x8] sm:$0xff]
    %v46 = vadd.f32 %v42, %v44
    %v47 = vadd.f32 %v43, %v45
    %48 = vst [vmem:[#allocation7] sm:$0xff] %v46
    %49 = vst [vmem:[#allocation7 + $0x8] sm:$0xff] %v47
    // Predicated region
    $region18: #{tpu_custom_call.1} parent=1 // pred_check
      _
    $region19: #{tpu_custom_call.1} parent=1 // pred_check_branch
      %51 = sbr.rel (0) target = $region21
    $region20: #{tpu_custom_call.1} parent=1 // pred_region
      %s53 = ssub.s32 256, 256
      %54 = vsyncadd [#allocation4], %s53
      %s55 = sshll.u32 [#allocation7], 4
      %s56 = int_to_ptr.vmem [resolvable:$true] %s55
      %61 = dma.vmem_to_hbm [thread:$0]  %s56, 256, %s2, [#allocation4], 128, 128, 8
    $region21: #{tpu_custom_call.1} parent=1 // pred_fallthru
      _
    // Predicated region
    $region22: #{tpu_custom_call.1} parent=1 // pred_check
      _
    $region23: #{tpu_custom_call.1} parent=1 // pred_check_branch
      %63 = sbr.rel (0) target = $region25
    $region24: #{tpu_custom_call.1} parent=1 // pred_region
      %64 = dma.done [#allocation4], 256
    $region25: #{tpu_custom_call.1} parent=1 // pred_fallthru
      _
    %65 = vsyncpa [#allocation3], 1
    %66 = vsyncpa [#allocation6], 1
    %67 = vsyncpa [#allocation4], 1

</llo_original>
